<compile_context>
chip_gen: v5e
topology: v5e:2x2
jax: 0.10.0
libtpu: 0.0.40
codegen_flags: <defaults>
</compile_context>

<pallas_src>
import functools
import math

import jax
import jax.numpy as jnp
from jax.experimental import pallas as pl
from jax.experimental.pallas import tpu as pltpu


def _round_up(n: int, m: int) -> int:
    return ((n + m - 1) // m) * m


def _cdiv(a: int, b: int) -> int:
    return (a + b - 1) // b


def _pad_dim(d: int, lane_align: int) -> int:
    # Never pad a tiny feature dim past a single 128-lane vreg.
    if d <= 128:
        return _round_up(d, 128)
    return _round_up(d, lane_align)


def _tpu_config():
    """Per-generation VMEM limit / lane alignment / token-tile target."""
    kind = ""
    try:
        kind = jax.devices()[0].device_kind.lower()
    except Exception:
        pass
    vmem_cap = None
    try:
        vmem_cap = int(pltpu.get_tpu_info().vmem_capacity_bytes)
    except Exception:
        pass
    if vmem_cap is None:
        # v5*/v6* have 128 MiB of VMEM per TensorCore; be conservative otherwise.
        vmem_cap = (128 << 20) if ("v5" in kind or "v6" in kind) else (64 << 20)
    lane_align = 256 if ("v6" in kind or "v7" in kind) else 128
    return {
        "vmem_limit": int(vmem_cap * 3 // 4),   # ~25% headroom for compiler scratch
        "lane_align": lane_align,
        "target_tile_t": 512 if vmem_cap >= (96 << 20) else 256,
    }


def _mlp_kernel(x_ref, gamma_ref, beta_ref, mask_ref, w1_ref, b1_ref, w2_ref,
                b2_ref, o_ref, xn_ref, acc_ref, *, eps, h_true, apply_mask):
    k = pl.program_id(1)

    # ---- first I-chunk for this token tile: LayerNorm + scratch init ----
    @pl.when(k == 0)
    def _():
        xf = x_ref[...].astype(jnp.float32)
        inv_h = 1.0 / float(h_true)
        mean = jnp.sum(xf, axis=-1, keepdims=True) * inv_h
        diff = xf - mean
        # Padded x lanes are zero; mask only the variance contribution.
        dm = diff * mask_ref[...] if apply_mask else diff
        var = jnp.sum(dm * dm, axis=-1, keepdims=True) * inv_h
        xn = diff * jax.lax.rsqrt(var + eps)
        xn = xn * gamma_ref[...] + beta_ref[...]
        xn_ref[...] = xn.astype(xn_ref.dtype)       # cached bf16 normalized acts
        acc_ref[...] = jnp.zeros_like(acc_ref)

    # ---- fc1 chunk (bf16 MXU operands, f32 accumulation) + exact GELU ----
    h = jnp.dot(xn_ref[...], w1_ref[...], preferred_element_type=jnp.float32)
    h = h + b1_ref[...]
    h = 0.5 * h * (1.0 + jax.lax.erf(h * (1.0 / math.sqrt(2.0))))

    # TODO(synk): dropout_p=0.1 is stochastic in training; implemented here as
    # eval-mode identity (use pltpu.prng_seed/prng_random_bits for train mode).

    # ---- partial fc2 for this chunk, accumulated in f32 ----
    acc_ref[...] += jnp.dot(h.astype(w2_ref.dtype), w2_ref[...],
                            preferred_element_type=jnp.float32)

    # ---- last I-chunk: bias + residual epilogue, single lane-dense store ----
    @pl.when(k == pl.num_programs(1) - 1)
    def _():
        y = acc_ref[...] + b2_ref[...]
        o_ref[...] = (x_ref[...].astype(jnp.float32) + y).astype(o_ref.dtype)


def prepare_params(w1, b1, w2, b2, gamma, beta, *, mxu_dtype=jnp.bfloat16,
                   lane_align=None):
    """Pad to lane-aligned shapes and cast weights to the MXU dtype ONCE.

    Hoisted out of the per-call hot path so forwards do not re-read/re-write
    the full f32 weights every step.  w1: [H, I] (= fc1.weight.T), w2: [I, H].
    """
    H, I = w1.shape
    if lane_align is None:
        lane_align = _tpu_config()["lane_align"]
    Hp = _pad_dim(H, lane_align)
    Ip = _pad_dim(I, lane_align)
    f32 = jnp.float32
    return {
        "w1": jnp.pad(w1.astype(mxu_dtype), ((0, Hp - H), (0, Ip - I))),
        "b1": jnp.pad(b1.astype(f32), (0, Ip - I)).reshape(1, Ip),
        "w2": jnp.pad(w2.astype(mxu_dtype), ((0, Ip - I), (0, Hp - H))),
        "b2": jnp.pad(b2.astype(f32), (0, Hp - H)).reshape(1, Hp),
        "gamma": jnp.pad(gamma.astype(f32), (0, Hp - H)).reshape(1, Hp),
        "beta": jnp.pad(beta.astype(f32), (0, Hp - H)).reshape(1, Hp),
        # f32 lane mask over the true hidden size (LayerNorm variance only).
        "mask": (jnp.arange(Hp) < H).astype(f32).reshape(1, Hp),
    }


def mlp_forward(x, params, *, eps=1e-5, tile_t=None, tile_i=None):
    """x: [..., H]; params: output of prepare_params (padded, bf16 weights)."""
    orig_shape = x.shape
    H = orig_shape[-1]
    Hp, Ip = params["w1"].shape
    x2d = x.reshape(-1, H)
    T = x2d.shape[0]

    cfg = _tpu_config()
    x_isz = jnp.dtype(x.dtype).itemsize
    w_isz = jnp.dtype(params["w1"].dtype).itemsize
    row_align = max(8, 32 // max(x_isz, 1))   # 8 rows for f32, 16 for bf16

    # ---- token tiling: balanced tiles; >=2 tiles so a second TC can be used ----
    if tile_t is None:
        n_t = max(_cdiv(T, cfg["target_tile_t"]), 2 if T >= 2 * row_align else 1)
        tile_t = _round_up(_cdiv(T, n_t), row_align)
    else:
        tile_t = _round_up(min(tile_t, _round_up(T, row_align)), row_align)
    Tp = _round_up(T, tile_t)

    # ---- VMEM budget -> resident (single-buffered) vs I-chunk-streamed weights ----
    budget = cfg["vmem_limit"] - (8 << 20)     # headroom for temporaries/spill

    def vmem_est(tt, ti, wbuf):
        b = 2 * tt * Hp * x_isz * 2            # x + out tiles, double-buffered
        b += tt * Hp * (w_isz + 4)             # xn scratch + f32 acc scratch
        b += tt * ti * (4 + w_isz)             # fc1 intermediate (f32 + bf16 cast)
        b += wbuf * (2 * Hp * ti * w_isz + ti * 4)   # w1 + w2 chunks + b1
        b += 5 * Hp * 4                        # gamma / beta / mask / b2
        return b

    if tile_i is None:
        while True:
            if vmem_est(tile_t, Ip, 1) <= budget:
                tile_i = Ip                    # fully resident, single-buffered
                break
            ti = (min(Ip, 2048) // 128) * 128  # streamed chunks, double-buffered
            found = None
            while ti >= 128:
                if Ip % ti == 0 and vmem_est(tile_t, ti, 2) <= budget:
                    found = ti
                    break
                ti -= 128
            if found is not None:
                tile_i = found
                break
            if tile_t > row_align:             # shrink the token tile and retry
                tile_t = max(row_align, _round_up(tile_t // 2, row_align))
                Tp = _round_up(T, tile_t)
            else:
                tile_i = 128                   # last resort
                break
    assert Ip % tile_i == 0
    nk = Ip // tile_i

    if Tp != T or Hp != H:
        x2d = jnp.pad(x2d, ((0, Tp - T), (0, Hp - H)))

    single = pl.Buffered(1)

    def _const_spec(shape):
        return pl.BlockSpec(shape, lambda i, k: (0, 0), pipeline_mode=single)

    if nk == 1:
        # Resident weights: single-buffer (halves the weight VMEM footprint).
        w1_spec = pl.BlockSpec((Hp, tile_i), lambda i, k: (0, 0), pipeline_mode=single)
        b1_spec = pl.BlockSpec((1, tile_i), lambda i, k: (0, 0), pipeline_mode=single)
        w2_spec = pl.BlockSpec((tile_i, Hp), lambda i, k: (0, 0), pipeline_mode=single)
    else:
        # Streamed weights: keep default double-buffering so DMAs hide under MXU.
        w1_spec = pl.BlockSpec((Hp, tile_i), lambda i, k: (0, k))
        b1_spec = pl.BlockSpec((1, tile_i), lambda i, k: (0, k))
        w2_spec = pl.BlockSpec((tile_i, Hp), lambda i, k: (k, 0))

    in_specs = [
        pl.BlockSpec((tile_t, Hp), lambda i, k: (i, 0)),   # x tile (pipelined)
        _const_spec((1, Hp)),                              # gamma
        _const_spec((1, Hp)),                              # beta
        _const_spec((1, Hp)),                              # mask
        w1_spec,
        b1_spec,
        w2_spec,
        _const_spec((1, Hp)),                              # b2
    ]

    n_t_tiles = Tp // tile_t
    cost = pl.CostEstimate(
        flops=4 * Tp * Hp * Ip,
        transcendentals=Tp * Ip,
        bytes_accessed=(2 * Tp * Hp * x_isz
                        + (n_t_tiles if nk > 1 else 1) * 2 * Hp * Ip * w_isz
                        + (Ip + 4 * Hp) * 4),
    )

    kernel = functools.partial(_mlp_kernel, eps=float(eps), h_true=H,
                               apply_mask=(Hp != H))

    out2d = pl.pallas_call(
        kernel,
        out_shape=jax.ShapeDtypeStruct((Tp, Hp), x.dtype),
        grid=(n_t_tiles, nk),
        in_specs=in_specs,
        out_specs=pl.BlockSpec((tile_t, Hp), lambda i, k: (i, 0)),
        scratch_shapes=[
            pltpu.VMEM((tile_t, Hp), params["w1"].dtype),   # cached LayerNorm(x)
            pltpu.VMEM((tile_t, Hp), jnp.float32),          # fc2 accumulator
        ],
        compiler_params=pltpu.CompilerParams(
            dimension_semantics=("parallel", "arbitrary"),
            vmem_limit_bytes=cfg["vmem_limit"],
        ),
        cost_estimate=cost,
    )(x2d, params["gamma"], params["beta"], params["mask"],
      params["w1"], params["b1"], params["w2"], params["b2"])

    return out2d[:T, :H].reshape(orig_shape)


def init_params(key, hidden_size, intermediate_size, dtype=jnp.float32):
    """Mirrors MLP._init_weights for gelu: trunc_normal(std=1/sqrt(fan_in))
    weights, zero biases, LayerNorm gamma=1/beta=0.  Weights stored transposed
    ([in, out]) so the kernel computes x @ W directly."""
    k1, k2 = jax.random.split(key)
    std1 = 1.0 / math.sqrt(hidden_size)
    std2 = 1.0 / math.sqrt(intermediate_size)
    w1 = (jax.random.truncated_normal(k1, -2.0, 2.0,
                                      (hidden_size, intermediate_size)) * std1
          ).astype(dtype)
    w2 = (jax.random.truncated_normal(k2, -2.0, 2.0,
                                      (intermediate_size, hidden_size)) * std2
          ).astype(dtype)
    b1 = jnp.zeros((intermediate_size,), dtype)
    b2 = jnp.zeros((hidden_size,), dtype)
    gamma = jnp.ones((hidden_size,), dtype)
    beta = jnp.zeros((hidden_size,), dtype)
    return w1, b1, w2, b2, gamma, beta


def mlp_reference(x, w1, b1, w2, b2, gamma, beta, eps=1e-5):
    """Pure-JAX f32 reference of the PyTorch forward (eval mode)."""
    xf = x.astype(jnp.float32)
    mean = xf.mean(-1, keepdims=True)
    var = ((xf - mean) ** 2).mean(-1, keepdims=True)
    xn = (xf - mean) * jax.lax.rsqrt(var + eps) * gamma + beta
    h = xn @ w1.astype(jnp.float32) + b1
    h = 0.5 * h * (1.0 + jax.lax.erf(h * (1.0 / math.sqrt(2.0))))
    y = h @ w2.astype(jnp.float32) + b2
    return (xf + y).astype(x.dtype)


if __name__ == "__main__":
    hidden_size = 32
    intermediate_size = 4 * hidden_size   # 128
    batch, seq = 2, 8

    key = jax.random.PRNGKey(0)
    kx, kp = jax.random.split(key)
    x = jax.random.normal(kx, (batch, seq, hidden_size), dtype=jnp.float32)
    w1, b1, w2, b2, gamma, beta = init_params(kp, hidden_size, intermediate_size)

    # Weight padding + bf16 cast hoisted out of the per-forward hot path.
    params = prepare_params(w1, b1, w2, b2, gamma, beta)

    fwd = jax.jit(functools.partial(mlp_forward, eps=1e-5))
    out = jax.block_until_ready(fwd(x, params))

    assert out.shape == x.shape and out.dtype == x.dtype
    assert bool(jnp.all(jnp.isfinite(out)))
    ref = mlp_reference(x, w1, b1, w2, b2, gamma, beta)
    max_err = float(jnp.max(jnp.abs(out - ref)))
    assert max_err < 5e-2, f"max abs err {max_err}"
    print("KERNEL_OK")
</pallas_src>

<mosaic_0001>
module attributes {stable_mosaic.version = 11 : i64} {
  func.func @_mlp_kernel(%arg0: i32, %arg1: i32, %arg2: memref<8x128xf32, #tpu.memory_space<vmem>>, %arg3: memref<1x128xf32, #tpu.memory_space<vmem>>, %arg4: memref<1x128xf32, #tpu.memory_space<vmem>>, %arg5: memref<1x128xf32, #tpu.memory_space<vmem>>, %arg6: memref<128x128xbf16, #tpu.memory_space<vmem>>, %arg7: memref<1x128xf32, #tpu.memory_space<vmem>>, %arg8: memref<128x128xbf16, #tpu.memory_space<vmem>>, %arg9: memref<1x128xf32, #tpu.memory_space<vmem>>, %arg10: memref<8x128xf32, #tpu.memory_space<vmem>>, %arg11: memref<8x128xbf16, #tpu.memory_space<vmem>>, %arg12: memref<8x128xf32, #tpu.memory_space<vmem>>) attributes {dimension_semantics = [#tpu.dimension_semantics<parallel>, #tpu.dimension_semantics<arbitrary>], iteration_bounds = array<i64: 2, 1>, scalar_prefetch = 0 : i64, scratch_operands = 2 : i64, tpu.core_type = #tpu.core_type<tc>, window_params = [{transform_indices = @transform_0, window_bounds = array<i64: 8, 128>}, {pipeline_mode = #tpu.pipeline_mode<synchronous>, transform_indices = @transform_1, window_bounds = array<i64: 1, 128>}, {pipeline_mode = #tpu.pipeline_mode<synchronous>, transform_indices = @transform_2, window_bounds = array<i64: 1, 128>}, {pipeline_mode = #tpu.pipeline_mode<synchronous>, transform_indices = @transform_3, window_bounds = array<i64: 1, 128>}, {pipeline_mode = #tpu.pipeline_mode<synchronous>, transform_indices = @transform_4, window_bounds = array<i64: 128, 128>}, {pipeline_mode = #tpu.pipeline_mode<synchronous>, transform_indices = @transform_5, window_bounds = array<i64: 1, 128>}, {pipeline_mode = #tpu.pipeline_mode<synchronous>, transform_indices = @transform_6, window_bounds = array<i64: 128, 128>}, {pipeline_mode = #tpu.pipeline_mode<synchronous>, transform_indices = @transform_7, window_bounds = array<i64: 1, 128>}, {transform_indices = @transform_8, window_bounds = array<i64: 8, 128>}]} {
    %c0_i32 = arith.constant 0 : i32
    %0 = arith.cmpi eq, %arg1, %c0_i32 : i32
    %1 = arith.extui %0 : i1 to i32
    %c0_i32_0 = arith.constant 0 : i32
    %2 = arith.cmpi ne, %1, %c0_i32_0 : i32
    scf.if %2 {
      %c0_18 = arith.constant 0 : index
      %c0_19 = arith.constant 0 : index
      %26 = vector.load %arg2[%c0_18, %c0_19] : memref<8x128xf32, #tpu.memory_space<vmem>>, vector<8x128xf32>
      %cst_20 = arith.constant dense<0.000000e+00> : vector<8xf32>
      %27 = vector.multi_reduction <add>, %26, %cst_20 [1] : vector<8x128xf32> to vector<8xf32>
      %28 = vector.shape_cast %27 : vector<8xf32> to vector<8x1xf32>
      %cst_21 = arith.constant 3.125000e-02 : f32
      %29 = vector.broadcast %cst_21 : f32 to vector<8x1xf32>
      %30 = arith.mulf %28, %29 : vector<8x1xf32>
      %31 = vector.broadcast %30 : vector<8x1xf32> to vector<8x128xf32>
      %32 = arith.subf %26, %31 : vector<8x128xf32>
      %c0_22 = arith.constant 0 : index
      %c0_23 = arith.constant 0 : index
      %33 = vector.load %arg5[%c0_22, %c0_23] : memref<1x128xf32, #tpu.memory_space<vmem>>, vector<1x128xf32>
      %34 = vector.broadcast %33 : vector<1x128xf32> to vector<8x128xf32>
      %35 = arith.mulf %32, %34 : vector<8x128xf32>
      %36 = arith.mulf %35, %35 : vector<8x128xf32>
      %cst_24 = arith.constant dense<0.000000e+00> : vector<8xf32>
      %37 = vector.multi_reduction <add>, %36, %cst_24 [1] : vector<8x128xf32> to vector<8xf32>
      %38 = vector.shape_cast %37 : vector<8xf32> to vector<8x1xf32>
      %cst_25 = arith.constant 3.125000e-02 : f32
      %39 = vector.broadcast %cst_25 : f32 to vector<8x1xf32>
      %40 = arith.mulf %38, %39 : vector<8x1xf32>
      %cst_26 = arith.constant 9.99999974E-6 : f32
      %41 = vector.broadcast %cst_26 : f32 to vector<8x1xf32>
      %42 = arith.addf %40, %41 : vector<8x1xf32>
      %43 = math.rsqrt %42 : vector<8x1xf32>
      %44 = vector.broadcast %43 : vector<8x1xf32> to vector<8x128xf32>
      %45 = arith.mulf %32, %44 : vector<8x128xf32>
      %c0_27 = arith.constant 0 : index
      %c0_28 = arith.constant 0 : index
      %46 = vector.load %arg3[%c0_27, %c0_28] : memref<1x128xf32, #tpu.memory_space<vmem>>, vector<1x128xf32>
      %47 = vector.broadcast %46 : vector<1x128xf32> to vector<8x128xf32>
      %48 = arith.mulf %45, %47 : vector<8x128xf32>
      %c0_29 = arith.constant 0 : index
      %c0_30 = arith.constant 0 : index
      %49 = vector.load %arg4[%c0_29, %c0_30] : memref<1x128xf32, #tpu.memory_space<vmem>>, vector<1x128xf32>
      %50 = vector.broadcast %49 : vector<1x128xf32> to vector<8x128xf32>
      %51 = arith.addf %48, %50 : vector<8x128xf32>
      %52 = arith.truncf %51 : vector<8x128xf32> to vector<8x128xbf16>
      %c0_31 = arith.constant 0 : index
      %c0_32 = arith.constant 0 : index
      %53 = vector.load %arg11[%c0_31, %c0_32] : memref<8x128xbf16, #tpu.memory_space<vmem>>, vector<8x128xbf16>
      tpu.vector_store %arg11[%c0_31, %c0_32], %52 {strides = array<i32>} : memref<8x128xbf16, #tpu.memory_space<vmem>>, vector<8x128xbf16>,
      %cst_33 = arith.constant 0.000000e+00 : f32
      %54 = vector.broadcast %cst_33 : f32 to vector<8x128xf32>
      %c0_34 = arith.constant 0 : index
      %c0_35 = arith.constant 0 : index
      %55 = vector.load %arg12[%c0_34, %c0_35] : memref<8x128xf32, #tpu.memory_space<vmem>>, vector<8x128xf32>
      tpu.vector_store %arg12[%c0_34, %c0_35], %54 {strides = array<i32>} : memref<8x128xf32, #tpu.memory_space<vmem>>, vector<8x128xf32>,
    } else {
    }
    %c0 = arith.constant 0 : index
    %c0_1 = arith.constant 0 : index
    %3 = vector.load %arg11[%c0, %c0_1] : memref<8x128xbf16, #tpu.memory_space<vmem>>, vector<8x128xbf16>
    %c0_2 = arith.constant 0 : index
    %c0_3 = arith.constant 0 : index
    %4 = vector.load %arg6[%c0_2, %c0_3] : memref<128x128xbf16, #tpu.memory_space<vmem>>, vector<128x128xbf16>
    %cst = arith.constant dense<0.000000e+00> : vector<8x128xf32>
    %5 = tpu.matmul %3, %4, %cst {dimension_numbers = #tpu.dot_dimension_numbers<[1], [0], [0], [1], [0, 0, 1, 1], [], []>} : vector<8x128xbf16>, vector<128x128xbf16>, vector<8x128xf32> -> vector<8x128xf32>
    %c0_4 = arith.constant 0 : index
    %c0_5 = arith.constant 0 : index
    %6 = vector.load %arg7[%c0_4, %c0_5] : memref<1x128xf32, #tpu.memory_space<vmem>>, vector<1x128xf32>
    %7 = vector.broadcast %6 : vector<1x128xf32> to vector<8x128xf32>
    %8 = arith.addf %5, %7 : vector<8x128xf32>
    %cst_6 = arith.constant 5.000000e-01 : f32
    %9 = vector.broadcast %cst_6 : f32 to vector<8x128xf32>
    %10 = arith.mulf %9, %8 : vector<8x128xf32>
    %cst_7 = arith.constant 0.707106769 : f32
    %11 = vector.broadcast %cst_7 : f32 to vector<8x128xf32>
    %12 = arith.mulf %8, %11 : vector<8x128xf32>
    %13 = math.erf %12 : vector<8x128xf32>
    %cst_8 = arith.constant 1.000000e+00 : f32
    %14 = vector.broadcast %cst_8 : f32 to vector<8x128xf32>
    %15 = arith.addf %14, %13 : vector<8x128xf32>
    %16 = arith.mulf %10, %15 : vector<8x128xf32>
    %c0_9 = arith.constant 0 : index
    %c0_10 = arith.constant 0 : index
    %17 = vector.load %arg12[%c0_9, %c0_10] : memref<8x128xf32, #tpu.memory_space<vmem>>, vector<8x128xf32>
    %18 = arith.truncf %16 : vector<8x128xf32> to vector<8x128xbf16>
    %c0_11 = arith.constant 0 : index
    %c0_12 = arith.constant 0 : index
    %19 = vector.load %arg8[%c0_11, %c0_12] : memref<128x128xbf16, #tpu.memory_space<vmem>>, vector<128x128xbf16>
    %cst_13 = arith.constant dense<0.000000e+00> : vector<8x128xf32>
    %20 = tpu.matmul %18, %19, %cst_13 {dimension_numbers = #tpu.dot_dimension_numbers<[1], [0], [0], [1], [0, 0, 1, 1], [], []>} : vector<8x128xbf16>, vector<128x128xbf16>, vector<8x128xf32> -> vector<8x128xf32>
    %21 = arith.addf %17, %20 : vector<8x128xf32>
    %c0_14 = arith.constant 0 : index
    %c0_15 = arith.constant 0 : index
    %22 = vector.load %arg12[%c0_14, %c0_15] : memref<8x128xf32, #tpu.memory_space<vmem>>, vector<8x128xf32>
    tpu.vector_store %arg12[%c0_14, %c0_15], %21 {strides = array<i32>} : memref<8x128xf32, #tpu.memory_space<vmem>>, vector<8x128xf32>,
    %c0_i32_16 = arith.constant 0 : i32
    %23 = arith.cmpi eq, %arg1, %c0_i32_16 : i32
    %24 = arith.extui %23 : i1 to i32
    %c0_i32_17 = arith.constant 0 : i32
    %25 = arith.cmpi ne, %24, %c0_i32_17 : i32
    scf.if %25 {
      %c0_18 = arith.constant 0 : index
      %c0_19 = arith.constant 0 : index
      %26 = vector.load %arg12[%c0_18, %c0_19] : memref<8x128xf32, #tpu.memory_space<vmem>>, vector<8x128xf32>
      %c0_20 = arith.constant 0 : index
      %c0_21 = arith.constant 0 : index
      %27 = vector.load %arg9[%c0_20, %c0_21] : memref<1x128xf32, #tpu.memory_space<vmem>>, vector<1x128xf32>
      %28 = vector.broadcast %27 : vector<1x128xf32> to vector<8x128xf32>
      %29 = arith.addf %26, %28 : vector<8x128xf32>
      %c0_22 = arith.constant 0 : index
      %c0_23 = arith.constant 0 : index
      %30 = vector.load %arg2[%c0_22, %c0_23] : memref<8x128xf32, #tpu.memory_space<vmem>>, vector<8x128xf32>
      %31 = arith.addf %30, %29 : vector<8x128xf32>
      %c0_24 = arith.constant 0 : index
      %c0_25 = arith.constant 0 : index
      %32 = vector.load %arg10[%c0_24, %c0_25] : memref<8x128xf32, #tpu.memory_space<vmem>>, vector<8x128xf32>
      tpu.vector_store %arg10[%c0_24, %c0_25], %31 {strides = array<i32>} : memref<8x128xf32, #tpu.memory_space<vmem>>, vector<8x128xf32>,
    } else {
    }
    return
  }
  func.func @transform_0(%arg0: i32, %arg1: i32) -> (i32, i32) {
    %c0_i32 = arith.constant 0 : i32
    %c0_i32_0 = arith.constant 0 : i32
    return %arg0, %c0_i32 : i32, i32
  }
  func.func @transform_1(%arg0: i32, %arg1: i32) -> (i32, i32) {
    %c0_i32 = arith.constant 0 : i32
    %c0_i32_0 = arith.constant 0 : i32
    %c0_i32_1 = arith.constant 0 : i32
    return %c0_i32, %c0_i32_0 : i32, i32
  }
  func.func @transform_2(%arg0: i32, %arg1: i32) -> (i32, i32) {
    %c0_i32 = arith.constant 0 : i32
    %c0_i32_0 = arith.constant 0 : i32
    %c0_i32_1 = arith.constant 0 : i32
    return %c0_i32, %c0_i32_0 : i32, i32
  }
  func.func @transform_3(%arg0: i32, %arg1: i32) -> (i32, i32) {
    %c0_i32 = arith.constant 0 : i32
    %c0_i32_0 = arith.constant 0 : i32
    %c0_i32_1 = arith.constant 0 : i32
    return %c0_i32, %c0_i32_0 : i32, i32
  }
  func.func @transform_4(%arg0: i32, %arg1: i32) -> (i32, i32) {
    %c0_i32 = arith.constant 0 : i32
    %c0_i32_0 = arith.constant 0 : i32
    %c0_i32_1 = arith.constant 0 : i32
    return %c0_i32, %c0_i32_0 : i32, i32
  }
  func.func @transform_5(%arg0: i32, %arg1: i32) -> (i32, i32) {
    %c0_i32 = arith.constant 0 : i32
    %c0_i32_0 = arith.constant 0 : i32
    %c0_i32_1 = arith.constant 0 : i32
    return %c0_i32, %c0_i32_0 : i32, i32
  }
  func.func @transform_6(%arg0: i32, %arg1: i32) -> (i32, i32) {
    %c0_i32 = arith.constant 0 : i32
    %c0_i32_0 = arith.constant 0 : i32
    %c0_i32_1 = arith.constant 0 : i32
    return %c0_i32, %c0_i32_0 : i32, i32
  }
  func.func @transform_7(%arg0: i32, %arg1: i32) -> (i32, i32) {
    %c0_i32 = arith.constant 0 : i32
    %c0_i32_0 = arith.constant 0 : i32
    %c0_i32_1 = arith.constant 0 : i32
    return %c0_i32, %c0_i32_0 : i32, i32
  }
  func.func @transform_8(%arg0: i32, %arg1: i32) -> (i32, i32) {
    %c0_i32 = arith.constant 0 : i32
    %c0_i32_0 = arith.constant 0 : i32
    return %arg0, %c0_i32 : i32, i32
  }
}

</mosaic_0001>

<llo_original>
// kernel: mlp_forward.1
$region0: #{mlp_forward.1}
  #allocation0 [shape = 'u32[]', space=smem, size = 0x4, offset = 0x4, fixed_abs, tag = 'smem constant byte address 0x4 - core index']
  #allocation1 [shape = 'u32[72,128]{1,0:T(1,128)}', space=vmem, size = 0x9000, scoped, tag = 'internal scratch']
  #allocation2 [shape = 'bf16[8,128]{1,0:T(8,128)(2,1)}', space=vmem, size = 0x800, scoped, tag = 'scratch operand']
  #allocation3 [shape = 'f32[8,128]{1,0:T(8,128)}', space=vmem, size = 0x1000, scoped, tag = 'scratch operand']
  %s0 = inlined_call_operand.vmem [shape: f32[16,128], index: 0, kind: input, shape index: {}]
  %s1 = inlined_call_operand.vmem [shape: f32[1,128], index: 1, kind: input, shape index: {}]
  %s2 = inlined_call_operand.vmem [shape: f32[1,128], index: 2, kind: input, shape index: {}]
  %s3 = inlined_call_operand.vmem [shape: f32[1,128], index: 3, kind: input, shape index: {}]
  %s4 = inlined_call_operand.hbm [shape: bf16[128,128], index: 4, kind: input, shape index: {}]
  %s5 = inlined_call_operand.vmem [shape: f32[1,128], index: 5, kind: input, shape index: {}]
  %s6 = inlined_call_operand.hbm [shape: bf16[128,128], index: 6, kind: input, shape index: {}]
  %s7 = inlined_call_operand.vmem [shape: f32[1,128], index: 7, kind: input, shape index: {}]
  %s8 = inlined_call_operand.vmem [shape: f32[16,128], index: 8, kind: output, shape index: {}]
  %s9 = sld [smem:[#allocation0]]
  $region81: #{mlp_forward.1} parent=0
    _
  %s11 = ssub.s32 1, %s9
  %s12 = scalar_select 0, %s11, %s9
  $region1: #{mlp_forward.1} parent=0
    #allocation4 [shape = 'u8[32768]{0}', space=vmem, size = 0x8000, scoped, tag = 'input window, operand 4, single buffered']
    #allocation5 [shape = 's32[2]{0}', space=sflag, size = 0x8, scoped, tag = 'scoped memory for mlp_forward.1']
    #allocation6 [shape = 'u8[32768]{0}', space=vmem, size = 0x8000, scoped, tag = 'input window, operand 6, single buffered']
    #allocation7 [shape = 's32[1]{0}', space=sflag, size = 0x4, scoped, tag = 'scoped memory for mlp_forward.1']
    %13 = vsyncpa [#allocation5], 0
    %14 = vsyncpa [#allocation7], 0
    loop: start=0, step=1, limit=4
    $region2: #{mlp_forward.1} parent=1 // loop_pre_header
      _
    $region3: #{mlp_forward.1} parent=1 // loop_header
      %s16 = sphi 0, %s20
      %p17 = scmp.ge.s32.totalorder %s16, 4
      %s23 = sphi 0, %s35
      %s24 = sphi 0, %s31
      %s25 = sphi 0, %s23
      %s26 = sphi 0, %s24
      %s27 = sphi 0, %s25
      %s28 = sphi 0, %s26
      %s38 = sphi 0, %s40
      %s41 = sphi 0, %s38
      %s42 = sphi 0, %s41
      %s58 = sphi 0, %s42
      %s62 = sphi 0, %s62
      %s64 = sphi 0, %s62
      %s65 = sphi 0, %s64
      %s79 = sphi 0, %s65
      %s83 = sphi 0, %s83
      %s85 = sphi 0, %s83
      %s86 = sphi 0, %s85
      %s100 = sphi 0, %s86
      %s104 = sphi 0, %s104
      %s106 = sphi 0, %s104
      %s107 = sphi 0, %s106
      %s121 = sphi 0, %s107
      %s125 = sphi 0, %s125
      %s127 = sphi 0, %s125
      %s128 = sphi 0, %s127
      %s142 = sphi 0, %s128
      %s146 = sphi 0, %s146
      %s148 = sphi 0, %s146
      %s149 = sphi 0, %s148
      %s163 = sphi 0, %s149
      %s167 = sphi 0, %s167
      %s169 = sphi 0, %s167
      %s170 = sphi 0, %s169
      %s184 = sphi 0, %s170
      %s188 = sphi 0, %s188
      %s190 = sphi 0, %s188
      %s191 = sphi 0, %s190
      %s205 = sphi 0, %s191
      %s211 = sphi 0, %s213
      %s214 = sphi 0, %s211
      %s215 = sphi 0, %s214
      %s231 = sphi 0, %s215
    $region4: #{mlp_forward.1} parent=1 // loop_header_branch
      %19 = sbr.rel (%p17) target = $region8
    $region5: #{mlp_forward.1} parent=1 // loop_body
      %s21 = ssub.s32 %s16, 1
      %s22 = ssub.s32 %s16, 2
      %s29 = sadd.s32 1, %s24
      %p30 = scmp.ge.s32.totalorder %s29, 1
      %s31 = scalar_select %p30, 0, %s29
      %s32 = sadd.s32 1, %s23
      %s33 = scalar_select %p30, %s32, %s23
      %p34 = scmp.ge.s32.totalorder %s33, 2
      %s35 = scalar_select %p34, 0, %s33
      %s36 = ssub.s32 %s23, %s35
      %p37 = scmp.eq.s32.totalorder %s36, 0
      %s39 = sadd.s32 %s38, 1
      %s40 = scalar_select %p37, %s38, %s39
      %p43 = pneg %p37
      %p44 = scmp.eq.s32.totalorder %s16, 1
      %p45 = por %p43, %p44
      %p46 = scmp.ne.s32.totalorder %s38, %s41
      %p47 = scmp.eq.s32.totalorder %s16, 0
      %p48 = por %p46, %p47
      %p49 = scmp.ne.s32.totalorder %s38, %s41
      %p50 = scmp.eq.s32.totalorder %s21, 1
      %p51 = por %p49, %p50
      %p52 = scmp.ne.s32.totalorder %s41, %s42
      %p53 = scmp.eq.s32.totalorder %s21, 0
      %p54 = por %p52, %p53
      %p55 = scmp.ne.s32.totalorder %s41, %s42
      %p56 = scmp.eq.s32.totalorder %s22, 1
      %p57 = por %p55, %p56
      %p59 = scmp.ne.s32.totalorder %s42, %s58
      %p60 = scmp.eq.s32.totalorder %s22, 0
      %p61 = por %p59, %p60
      %s63 = sadd.s32 %s62, 1
      %p66 = scmp.eq.s32.totalorder %s16, 1
      %p67 = scmp.ne.s32.totalorder %s62, %s64
      %p68 = scmp.eq.s32.totalorder %s16, 0
      %p69 = por %p67, %p68
      %p70 = scmp.ne.s32.totalorder %s62, %s64
      %p71 = scmp.eq.s32.totalorder %s21, 1
      %p72 = por %p70, %p71
      %p73 = scmp.ne.s32.totalorder %s64, %s65
      %p74 = scmp.eq.s32.totalorder %s21, 0
      %p75 = por %p73, %p74
      %p76 = scmp.ne.s32.totalorder %s64, %s65
      %p77 = scmp.eq.s32.totalorder %s22, 1
      %p78 = por %p76, %p77
      %p80 = scmp.ne.s32.totalorder %s65, %s79
      %p81 = scmp.eq.s32.totalorder %s22, 0
      %p82 = por %p80, %p81
      %s84 = sadd.s32 %s83, 1
      %p87 = scmp.eq.s32.totalorder %s16, 1
      %p88 = scmp.ne.s32.totalorder %s83, %s85
      %p89 = scmp.eq.s32.totalorder %s16, 0
      %p90 = por %p88, %p89
      %p91 = scmp.ne.s32.totalorder %s83, %s85
      %p92 = scmp.eq.s32.totalorder %s21, 1
      %p93 = por %p91, %p92
      %p94 = scmp.ne.s32.totalorder %s85, %s86
      %p95 = scmp.eq.s32.totalorder %s21, 0
      %p96 = por %p94, %p95
      %p97 = scmp.ne.s32.totalorder %s85, %s86
      %p98 = scmp.eq.s32.totalorder %s22, 1
      %p99 = por %p97, %p98
      %p101 = scmp.ne.s32.totalorder %s86, %s100
      %p102 = scmp.eq.s32.totalorder %s22, 0
      %p103 = por %p101, %p102
      %s105 = sadd.s32 %s104, 1
      %p108 = scmp.eq.s32.totalorder %s16, 1
      %p109 = scmp.ne.s32.totalorder %s104, %s106
      %p110 = scmp.eq.s32.totalorder %s16, 0
      %p111 = por %p109, %p110
      %p112 = scmp.ne.s32.totalorder %s104, %s106
      %p113 = scmp.eq.s32.totalorder %s21, 1
      %p114 = por %p112, %p113
      %p115 = scmp.ne.s32.totalorder %s106, %s107
      %p116 = scmp.eq.s32.totalorder %s21, 0
      %p117 = por %p115, %p116
      %p118 = scmp.ne.s32.totalorder %s106, %s107
      %p119 = scmp.eq.s32.totalorder %s22, 1
      %p120 = por %p118, %p119
      %p122 = scmp.ne.s32.totalorder %s107, %s121
      %p123 = scmp.eq.s32.totalorder %s22, 0
      %p124 = por %p122, %p123
      %s126 = sadd.s32 %s125, 1
      %p129 = scmp.eq.s32.totalorder %s16, 1
      %p130 = scmp.ne.s32.totalorder %s125, %s127
      %p131 = scmp.eq.s32.totalorder %s16, 0
      %p132 = por %p130, %p131
      %p133 = scmp.ne.s32.totalorder %s125, %s127
      %p134 = scmp.eq.s32.totalorder %s21, 1
      %p135 = por %p133, %p134
      %p136 = scmp.ne.s32.totalorder %s127, %s128
      %p137 = scmp.eq.s32.totalorder %s21, 0
      %p138 = por %p136, %p137
      %p139 = scmp.ne.s32.totalorder %s127, %s128
      %p140 = scmp.eq.s32.totalorder %s22, 1
      %p141 = por %p139, %p140
      %p143 = scmp.ne.s32.totalorder %s128, %s142
      %p144 = scmp.eq.s32.totalorder %s22, 0
      %p145 = por %p143, %p144
      %s147 = sadd.s32 %s146, 1
      %p150 = scmp.eq.s32.totalorder %s16, 1
      %p151 = scmp.ne.s32.totalorder %s146, %s148
      %p152 = scmp.eq.s32.totalorder %s16, 0
      %p153 = por %p151, %p152
      %p154 = scmp.ne.s32.totalorder %s146, %s148
      %p155 = scmp.eq.s32.totalorder %s21, 1
      %p156 = por %p154, %p155
      %p157 = scmp.ne.s32.totalorder %s148, %s149
      %p158 = scmp.eq.s32.totalorder %s21, 0
      %p159 = por %p157, %p158
      %p160 = scmp.ne.s32.totalorder %s148, %s149
      %p161 = scmp.eq.s32.totalorder %s22, 1
      %p162 = por %p160, %p161
      %p164 = scmp.ne.s32.totalorder %s149, %s163
      %p165 = scmp.eq.s32.totalorder %s22, 0
      %p166 = por %p164, %p165
      %s168 = sadd.s32 %s167, 1
      %p171 = scmp.eq.s32.totalorder %s16, 1
      %p172 = scmp.ne.s32.totalorder %s167, %s169
      %p173 = scmp.eq.s32.totalorder %s16, 0
      %p174 = por %p172, %p173
      %p175 = scmp.ne.s32.totalorder %s167, %s169
      %p176 = scmp.eq.s32.totalorder %s21, 1
      %p177 = por %p175, %p176
      %p178 = scmp.ne.s32.totalorder %s169, %s170
      %p179 = scmp.eq.s32.totalorder %s21, 0
      %p180 = por %p178, %p179
      %p181 = scmp.ne.s32.totalorder %s169, %s170
      %p182 = scmp.eq.s32.totalorder %s22, 1
      %p183 = por %p181, %p182
      %p185 = scmp.ne.s32.totalorder %s170, %s184
      %p186 = scmp.eq.s32.totalorder %s22, 0
      %p187 = por %p185, %p186
      %s189 = sadd.s32 %s188, 1
      %p192 = scmp.eq.s32.totalorder %s16, 1
      %p193 = scmp.ne.s32.totalorder %s188, %s190
      %p194 = scmp.eq.s32.totalorder %s16, 0
      %p195 = por %p193, %p194
      %p196 = scmp.ne.s32.totalorder %s188, %s190
      %p197 = scmp.eq.s32.totalorder %s21, 1
      %p198 = por %p196, %p197
      %p199 = scmp.ne.s32.totalorder %s190, %s191
      %p200 = scmp.eq.s32.totalorder %s21, 0
      %p201 = por %p199, %p200
      %p202 = scmp.ne.s32.totalorder %s190, %s191
      %p203 = scmp.eq.s32.totalorder %s22, 1
      %p204 = por %p202, %p203
      %p206 = scmp.ne.s32.totalorder %s191, %s205
      %p207 = scmp.eq.s32.totalorder %s22, 0
      %p208 = por %p206, %p207
      %s209 = ssub.s32 %s23, %s35
      %p210 = scmp.eq.s32.totalorder %s209, 0
      %s212 = sadd.s32 %s211, 1
      %s213 = scalar_select %p210, %s211, %s212
      %p216 = pneg %p210
      %p217 = scmp.eq.s32.totalorder %s16, 1
      %p218 = por %p216, %p217
      %p219 = scmp.ne.s32.totalorder %s211, %s214
      %p220 = scmp.eq.s32.totalorder %s16, 0
      %p221 = por %p219, %p220
      %p222 = scmp.ne.s32.totalorder %s211, %s214
      %p223 = scmp.eq.s32.totalorder %s21, 1
      %p224 = por %p222, %p223
      %p225 = scmp.ne.s32.totalorder %s214, %s215
      %p226 = scmp.eq.s32.totalorder %s21, 0
      %p227 = por %p225, %p226
      %p228 = scmp.ne.s32.totalorder %s214, %s215
      %p229 = scmp.eq.s32.totalorder %s22, 1
      %p230 = por %p228, %p229
      %p232 = scmp.ne.s32.totalorder %s215, %s231
      %p233 = scmp.eq.s32.totalorder %s22, 0
      %p234 = por %p232, %p233
      %p235 = scmp.le.s32.totalorder 1, %s16
      %p236 = scmp.lt.s32.totalorder %s16, 3
      %p237 = pnand %p235, %p236
      %p238 = pneg %p237
      // Predicated region
      $region9: #{mlp_forward.1} parent=5 // pred_check
        _
      $region10: #{mlp_forward.1} parent=5 // pred_check_branch
        %240 = sbr.rel (%p237) target = $region12
      $region11: #{mlp_forward.1} parent=5 // pred_region
        %s241 = ssub.s32 %s16, 1
        // Predicated region
        $region13: #{mlp_forward.1} parent=11 // pred_check
          %p242 = pneg %p75
        $region14: #{mlp_forward.1} parent=11 // pred_check_branch
          %244 = sbr.rel (%p242) target = $region16
        $region15: #{mlp_forward.1} parent=11 // pred_region
          _
        $region16: #{mlp_forward.1} parent=11 // pred_fallthru
          _
        // Predicated region
        $region17: #{mlp_forward.1} parent=11 // pred_check
          %p245 = pneg %p96
        $region18: #{mlp_forward.1} parent=11 // pred_check_branch
          %247 = sbr.rel (%p245) target = $region20
        $region19: #{mlp_forward.1} parent=11 // pred_region
          _
        $region20: #{mlp_forward.1} parent=11 // pred_fallthru
          _
        // Predicated region
        $region21: #{mlp_forward.1} parent=11 // pred_check
          %p248 = pneg %p117
        $region22: #{mlp_forward.1} parent=11 // pred_check_branch
          %250 = sbr.rel (%p248) target = $region24
        $region23: #{mlp_forward.1} parent=11 // pred_region
          _
        $region24: #{mlp_forward.1} parent=11 // pred_fallthru
          _
        // Predicated region
        $region25: #{mlp_forward.1} parent=11 // pred_check
          %p251 = pneg %p138
        $region26: #{mlp_forward.1} parent=11 // pred_check_branch
          %253 = sbr.rel (%p251) target = $region28
        $region27: #{mlp_forward.1} parent=11 // pred_region
          %255 = vsyncadd [#allocation5], 0
          %s256 = sshll.u32 %s4, 4
          %s257 = int_to_ptr.hbm [resolvable:$true] %s256
          %s258 = sshll.u32 [#allocation4], 4
          %s259 = int_to_ptr.vmem [resolvable:$true] %s258
          %264 = dma.hbm_to_vmem [thread:$0]  %s257, 1024, %s259, [#allocation5], 64, 64, 4
        $region28: #{mlp_forward.1} parent=11 // pred_fallthru
          _
        // Predicated region
        $region29: #{mlp_forward.1} parent=11 // pred_check
          %p265 = pneg %p159
        $region30: #{mlp_forward.1} parent=11 // pred_check_branch
          %267 = sbr.rel (%p265) target = $region32
        $region31: #{mlp_forward.1} parent=11 // pred_region
          _
        $region32: #{mlp_forward.1} parent=11 // pred_fallthru
          _
        // Predicated region
        $region33: #{mlp_forward.1} parent=11 // pred_check
          %p268 = pneg %p180
        $region34: #{mlp_forward.1} parent=11 // pred_check_branch
          %270 = sbr.rel (%p268) target = $region36
        $region35: #{mlp_forward.1} parent=11 // pred_region
          %272 = vsyncadd [#allocation7], 0
          %s273 = sshll.u32 %s6, 4
          %s274 = int_to_ptr.hbm [resolvable:$true] %s273
          %s275 = sshll.u32 [#allocation6], 4
          %s276 = int_to_ptr.vmem [resolvable:$true] %s275
          %281 = dma.hbm_to_vmem [thread:$0]  %s274, 1024, %s276, [#allocation7], 64, 64, 4
        $region36: #{mlp_forward.1} parent=11 // pred_fallthru
          _
        // Predicated region
        $region37: #{mlp_forward.1} parent=11 // pred_check
          %p282 = pneg %p201
        $region38: #{mlp_forward.1} parent=11 // pred_check_branch
          %284 = sbr.rel (%p282) target = $region40
        $region39: #{mlp_forward.1} parent=11 // pred_region
          _
        $region40: #{mlp_forward.1} parent=11 // pred_fallthru
          _
      $region12: #{mlp_forward.1} parent=5 // pred_fallthru
        _
      %p285 = scmp.lt.s32.totalorder %s16, 2
      // Predicated region
      $region41: #{mlp_forward.1} parent=5 // pred_check
        %p286 = pneg %p285
      $region42: #{mlp_forward.1} parent=5 // pred_check_branch
        %288 = sbr.rel (%p286) target = $region44
      $region43: #{mlp_forward.1} parent=5 // pred_region
        // Predicated region
        $region45: #{mlp_forward.1} parent=43 // pred_check
          %p289 = pneg %p48
        $region46: #{mlp_forward.1} parent=43 // pred_check_branch
          %291 = sbr.rel (%p289) target = $region48
        $region47: #{mlp_forward.1} parent=43 // pred_region
          %p292 = scmp.lt.s32.totalorder %s23, 1
          %s293 = scalar_select %p292, %s23, 1
          %s294 = smul.addr %s293, 8
          %s295 = scalar_lea.vmem %s0, %s294
        $region48: #{mlp_forward.1} parent=43 // pred_fallthru
          _
      $region44: #{mlp_forward.1} parent=5 // pred_fallthru
        _
      %p296 = scmp.le.s32.totalorder 1, %s16
      %p297 = scmp.lt.s32.totalorder %s16, 3
      %p298 = pnand %p296, %p297
      %p299 = pneg %p298
      // Predicated region
      $region49: #{mlp_forward.1} parent=5 // pred_check
        _
      $region50: #{mlp_forward.1} parent=5 // pred_check_branch
        %301 = sbr.rel (%p298) target = $region52
      $region51: #{mlp_forward.1} parent=5 // pred_region
        %s302 = ssub.s32 %s16, 1
        // Predicated region
        $region53: #{mlp_forward.1} parent=51 // pred_check
          %p303 = pneg %p138
        $region54: #{mlp_forward.1} parent=51 // pred_check_branch
          %305 = sbr.rel (%p303) target = $region56
        $region55: #{mlp_forward.1} parent=51 // pred_region
          %307 = dma.done [#allocation5], 1024
        $region56: #{mlp_forward.1} parent=51 // pred_fallthru
          _
        // Predicated region
        $region57: #{mlp_forward.1} parent=51 // pred_check
          %p308 = pneg %p180
        $region58: #{mlp_forward.1} parent=51 // pred_check_branch
          %310 = sbr.rel (%p308) target = $region60
        $region59: #{mlp_forward.1} parent=51 // pred_region
          %312 = dma.done [#allocation7], 1024
        $region60: #{mlp_forward.1} parent=51 // pred_fallthru
          _
        %p313 = scmp.lt.s32.totalorder %s25, 1
        %s314 = scalar_select %p313, %s25, 1
        %s315 = smul.addr %s314, 8
        %s316 = scalar_lea.vmem %s0, %s315
        %p317 = pneg %p54
        %p318 = pneg %p51
        %p319 = pneg %p75
        %p320 = pneg %p72
        %p321 = pneg %p96
        %p322 = pneg %p93
        %p323 = pneg %p117
        %p324 = pneg %p114
        %p325 = pneg %p138
        %p326 = pneg %p135
        %p327 = pneg %p159
        %p328 = pneg %p156
        %p329 = pneg %p180
        %p330 = pneg %p177
        %p331 = pneg %p201
        %p332 = pneg %p198
        %p333 = pneg %p227
        %p334 = pneg %p224
        %p335 = scmp.lt.s32.totalorder %s25, 1
        %s336 = scalar_select %p335, %s25, 1
        %s337 = smul.addr %s336, 8
        %s338 = scalar_lea.vmem %s8, %s337
        %p339 = scmp.lt.s32.totalorder %s25, 1
        %s340 = scalar_select %p339, %s25, 1
        %s341 = smul.addr %s340, 8
        %s342 = scalar_lea.vmem %s0, %s341
        %p343 = scmp.lt.s32.totalorder %s25, 1
        %s344 = scalar_select %p343, %s25, 1
        %s345 = smul.addr %s344, 8
        %s346 = scalar_lea.vmem %s8, %s345
        %p347 = scmp.eq.s32.totalorder %s26, 0
        // Predicated region
        $region61: #{mlp_forward.1} parent=51 // pred_check
          %p348 = pneg %p347
        $region62: #{mlp_forward.1} parent=51 // pred_check_branch
          %350 = sbr.rel (%p348) target = $region64
        $region63: #{mlp_forward.1} parent=51 // pred_region
          %v351 = vld [vmem:[%s342] sm:$0xff]
          %352 = vadd.xlane.f32.xlu0 %v351
          %v353 = vpop.xlane.xlu0 %352
          %v354 = vmul.f32 %v353, 0.03125
          %v355 = vsub.f32 %v351, %v354
          %v356 = vld [vmem:[%s3] sm:$0x1]
          %v358 = vperm.slane %v356, 0
          %v360 = vmul.f32 %v355, %v358
          %v361 = vmul.f32 %v360, %v360
          %362 = vadd.xlane.f32.xlu0 %v361
          %v363 = vpop.xlane.xlu0 %362
          %v364 = vmul.f32 %v363, 0.03125
          %v365 = vadd.f32 %v364, 1e-05
          %v366 = vrsqrt.pop %v365
          %v367 = vmul.f32 %v366, %v365
          %v368 = vmul.f32 %v367, %v366
          %v369 = vmul.f32 0.5, %v368
          %v370 = vsub.f32 1.5, %v369
          %v371 = vmul.f32 %v366, %v370
          %vm372 = vweird.f32 %v365
          %vm373 = vweird.f32 %v366
          %vm374 = vmor %vm372, %vm373
          %v375 = vsel %vm374, %v366, %v371
          %v376 = vmul.f32 %v355, %v375
          %v377 = vld [vmem:[%s1] sm:$0x1]
          %v379 = vperm.slane %v377, 0
          %v381 = vmul.f32 %v376, %v379
          %v382 = vld [vmem:[%s2] sm:$0x1]
          %v384 = vperm.slane %v382, 0
          %v386 = vadd.f32 %v381, %v384
          %v387 = vpack.c.bf16 %v386, %v386
          %388 = vst [vmem:[#allocation2] sm:$0xf] %v387
          %389 = vst [vmem:[#allocation3] sm:$0xff] 0.0
        $region64: #{mlp_forward.1} parent=51 // pred_fallthru
          _
        %v390 = vld [vmem:[#allocation2] sm:$0xf]
        %v391 = vld [vmem:[#allocation4] sm:$0xf]
        %v392 = vld [vmem:[#allocation4 + $0x4] sm:$0xf]
        %v393 = vld [vmem:[#allocation4 + $0x8] sm:$0xf]
        %v394 = vld [vmem:[#allocation4 + $0xc] sm:$0xf]
        %v395 = vld [vmem:[#allocation4 + $0x10] sm:$0xf]
        %v396 = vld [vmem:[#allocation4 + $0x14] sm:$0xf]
        %v397 = vld [vmem:[#allocation4 + $0x18] sm:$0xf]
        %v398 = vld [vmem:[#allocation4 + $0x1c] sm:$0xf]
        %v399 = vld [vmem:[#allocation4 + $0x20] sm:$0xf]
        %v400 = vld [vmem:[#allocation4 + $0x24] sm:$0xf]
        %v401 = vld [vmem:[#allocation4 + $0x28] sm:$0xf]
        %v402 = vld [vmem:[#allocation4 + $0x2c] sm:$0xf]
        %v403 = vld [vmem:[#allocation4 + $0x30] sm:$0xf]
        %v404 = vld [vmem:[#allocation4 + $0x34] sm:$0xf]
        %v405 = vld [vmem:[#allocation4 + $0x38] sm:$0xf]
        %v406 = vld [vmem:[#allocation4 + $0x3c] sm:$0xf]
        %v407 = vld [vmem:[%s5] sm:$0x1]
        %v409 = vperm.slane %v407, 0
        %v427 = vunpack.c.l.b16 %v391
        %v428 = vunpack.c.l.b16 %v392
        %v429 = vunpack.c.l.b16 %v393
        %v430 = vunpack.c.l.b16 %v394
        %v431 = vunpack.c.l.b16 %v395
        %v432 = vunpack.c.l.b16 %v396
        %v433 = vunpack.c.l.b16 %v397
        %v434 = vunpack.c.l.b16 %v398
        %v435 = vunpack.c.l.b16 %v399
        %v436 = vunpack.c.l.b16 %v400
        %v437 = vunpack.c.l.b16 %v401
        %v438 = vunpack.c.l.b16 %v402
        %v439 = vunpack.c.l.b16 %v403
        %v440 = vunpack.c.l.b16 %v404
        %v441 = vunpack.c.l.b16 %v405
        %v442 = vunpack.c.l.b16 %v406
        %v443 = vpack.c.b16 %v428, %v427
        %v444 = vpack.c.b16 %v430, %v429
        %v445 = vpack.c.b16 %v432, %v431
        %v446 = vpack.c.b16 %v434, %v433
        %v447 = vpack.c.b16 %v436, %v435
        %v448 = vpack.c.b16 %v438, %v437
        %v449 = vpack.c.b16 %v440, %v439
        %v450 = vpack.c.b16 %v442, %v441
        %459 = vmatpush.bf16.msra.mxu0 %v450
        %460 = vmatpush.bf16.msra.mxu0 %v449
        %461 = vmatpush.bf16.msra.mxu0 %v448
        %462 = vmatpush.bf16.msra.mxu0 %v447
        %463 = vmatpush.bf16.msra.mxu0 %v446
        %464 = vmatpush.bf16.msra.mxu0 %v445
        %465 = vmatpush.bf16.msra.mxu0 %v444
        %466 = vmatpush.bf16.msra.mxu0 %v443
        %467 = vmatmul.bf16.gmra.mxu0 %v390
        %v468 = vpop.f32.mrf.mxu0
        %v469 = vadd.f32 %v409, %v468
        %v470 = vpop.f32.mrf.mxu0
        %471 = vdwg.mxu0
        %v472 = vmul.f32 %v469, 0.5
        %v473 = vmul.f32 %v469, 0.70710677
        %v474 = vmul.f32 %v473, %v473
        %v475 = vmin.f32 16.0, %v474
        %v476 = vmul.f32 %v475, 2.1237322e-06
        %v477 = vadd.f32 %v476, 0.00028619796
        %v478 = vmul.f32 %v475, %v477
        %v479 = vadd.f32 %v478, 0.0036580483
        %v480 = vmul.f32 %v475, %v479
        %v481 = vadd.f32 %v480, 0.05243302
        %v482 = vmul.f32 %v475, %v481
        %v483 = vadd.f32 %v482, 0.18741608
        %v484 = vmul.f32 %v475, %v483
        %v485 = vadd.f32 %v484, 1.1283791
        %v486 = vmul.f32 %v473, %v485
        %v487 = vmul.f32 %v475, 3.8918573e-05
        %v488 = vadd.f32 %v487, 0.001143296
        %v489 = vmul.f32 %v475, %v488
        %v490 = vadd.f32 %v489, 0.014752088
        %v491 = vmul.f32 %v475, %v490
        %v492 = vadd.f32 %v491, 0.112945676
        %v493 = vmul.f32 %v475, %v492
        %v494 = vadd.f32 %v493, 0.4994258
        %v495 = vmul.f32 %v475, %v494
        %v496 = vadd.f32 %v495, 1.0
        %v497 = vrcp.pop %v496
        %v498 = vmul.f32 %v496, %v497
        %v499 = vsub.f32 1.0, %v498
        %v500 = vmul.f32 %v497, %v499
        %v501 = vadd.f32 %v497, %v500
        %vm502 = vweird.f32 %v496
        %vm503 = vweird.f32 %v497
        %vm504 = vmor %vm502, %vm503
        %v505 = vsel %vm504, %v497, %v501
        %v506 = vand.u32 2147483647, %v496
        %vm507 = vcmp.eq.f32.partialorder %v506, 8.507059e+37
        %v508 = vand.u32 %v496, 2147483648
        %v509 = vor.u32 1.1754944e-38, %v508
        %v510 = vsel %vm507, %v509, %v505
        %v511 = vmul.f32 %v486, %v510
        %v512 = vmin.f32 %v511, 1.0
        %v513 = vmax.f32 %v512, -1.0
        %v514 = vadd.f32 %v513, 1.0
        %v515 = vmul.f32 %v472, %v514
        %v516 = vld [vmem:[#allocation3] sm:$0xff]
        %v517 = vpack.c.bf16 %v515, %v515
        %v518 = vld [vmem:[#allocation6] sm:$0xf]
        %v519 = vld [vmem:[#allocation6 + $0x4] sm:$0xf]
        %v520 = vld [vmem:[#allocation6 + $0x8] sm:$0xf]
        %v521 = vld [vmem:[#allocation6 + $0xc] sm:$0xf]
        %v522 = vld [vmem:[#allocation6 + $0x10] sm:$0xf]
        %v523 = vld [vmem:[#allocation6 + $0x14] sm:$0xf]
        %v524 = vld [vmem:[#allocation6 + $0x18] sm:$0xf]
        %v525 = vld [vmem:[#allocation6 + $0x1c] sm:$0xf]
        %v526 = vld [vmem:[#allocation6 + $0x20] sm:$0xf]
        %v527 = vld [vmem:[#allocation6 + $0x24] sm:$0xf]
        %v528 = vld [vmem:[#allocation6 + $0x28] sm:$0xf]
        %v529 = vld [vmem:[#allocation6 + $0x2c] sm:$0xf]
        %v530 = vld [vmem:[#allocation6 + $0x30] sm:$0xf]
        %v531 = vld [vmem:[#allocation6 + $0x34] sm:$0xf]
        %v532 = vld [vmem:[#allocation6 + $0x38] sm:$0xf]
        %v533 = vld [vmem:[#allocation6 + $0x3c] sm:$0xf]
        %v550 = vunpack.c.l.b16 %v518
        %v551 = vunpack.c.l.b16 %v519
        %v552 = vunpack.c.l.b16 %v520
        %v553 = vunpack.c.l.b16 %v521
        %v554 = vunpack.c.l.b16 %v522
        %v555 = vunpack.c.l.b16 %v523
        %v556 = vunpack.c.l.b16 %v524
        %v557 = vunpack.c.l.b16 %v525
        %v558 = vunpack.c.l.b16 %v526
        %v559 = vunpack.c.l.b16 %v527
        %v560 = vunpack.c.l.b16 %v528
        %v561 = vunpack.c.l.b16 %v529
        %v562 = vunpack.c.l.b16 %v530
        %v563 = vunpack.c.l.b16 %v531
        %v564 = vunpack.c.l.b16 %v532
        %v565 = vunpack.c.l.b16 %v533
        %v566 = vpack.c.b16 %v551, %v550
        %v567 = vpack.c.b16 %v553, %v552
        %v568 = vpack.c.b16 %v555, %v554
        %v569 = vpack.c.b16 %v557, %v556
        %v570 = vpack.c.b16 %v559, %v558
        %v571 = vpack.c.b16 %v561, %v560
        %v572 = vpack.c.b16 %v563, %v562
        %v573 = vpack.c.b16 %v565, %v564
        %582 = vmatpush.bf16.msra.mxu0 %v573
        %583 = vmatpush.bf16.msra.mxu0 %v572
        %584 = vmatpush.bf16.msra.mxu0 %v571
        %585 = vmatpush.bf16.msra.mxu0 %v570
        %586 = vmatpush.bf16.msra.mxu0 %v569
        %587 = vmatpush.bf16.msra.mxu0 %v568
        %588 = vmatpush.bf16.msra.mxu0 %v567
        %589 = vmatpush.bf16.msra.mxu0 %v566
        %590 = vmatmul.bf16.gmra.mxu0 %v517
        %v591 = vpop.f32.mrf.mxu0
        %v592 = vadd.f32 0.0, %v591
        %v593 = vpop.f32.mrf.mxu0
        %594 = vdwg.mxu0
        %v595 = vadd.f32 %v516, %v592
        %596 = vst [vmem:[#allocation3] sm:$0xff] %v595
        // Predicated region
        $region65: #{mlp_forward.1} parent=51 // pred_check
          %p597 = pneg %p347
        $region66: #{mlp_forward.1} parent=51 // pred_check_branch
          %599 = sbr.rel (%p597) target = $region68
        $region67: #{mlp_forward.1} parent=51 // pred_region
          %v600 = vld [vmem:[#allocation3] sm:$0xff]
          %v601 = vld [vmem:[%s7] sm:$0x1]
          %v603 = vperm.slane %v601, 0
          %v605 = vadd.f32 %v600, %v603
          %v606 = vld [vmem:[%s342] sm:$0xff]
          %v607 = vadd.f32 %v606, %v605
          %608 = vst [vmem:[%s346] sm:$0xff] %v607
        $region68: #{mlp_forward.1} parent=51 // pred_fallthru
          _
        %p609 = scmp.lt.s32.totalorder %s25, 1
        %s610 = scalar_select %p609, %s25, 1
        %s611 = smul.addr %s610, 8
        %s612 = scalar_lea.vmem %s8, %s611
        // Predicated region
        $region69: #{mlp_forward.1} parent=51 // pred_check
          %p613 = pneg %p224
        $region70: #{mlp_forward.1} parent=51 // pred_check_branch
          %615 = sbr.rel (%p613) target = $region72
        $region71: #{mlp_forward.1} parent=51 // pred_region
          _
        $region72: #{mlp_forward.1} parent=51 // pred_fallthru
          _
      $region52: #{mlp_forward.1} parent=5 // pred_fallthru
        _
      %p616 = scmp.le.s32.totalorder 2, %s16
      // Predicated region
      $region73: #{mlp_forward.1} parent=5 // pred_check
        %p617 = pneg %p616
      $region74: #{mlp_forward.1} parent=5 // pred_check_branch
        %619 = sbr.rel (%p617) target = $region76
      $region75: #{mlp_forward.1} parent=5 // pred_region
        %s620 = ssub.s32 %s16, 2
        // Predicated region
        $region77: #{mlp_forward.1} parent=75 // pred_check
          %p621 = pneg %p230
        $region78: #{mlp_forward.1} parent=75 // pred_check_branch
          %623 = sbr.rel (%p621) target = $region80
        $region79: #{mlp_forward.1} parent=75 // pred_region
          %p624 = scmp.lt.s32.totalorder %s27, 1
          %s625 = scalar_select %p624, %s27, 1
          %s626 = smul.addr %s625, 8
          %s627 = scalar_lea.vmem %s8, %s626
        $region80: #{mlp_forward.1} parent=75 // pred_fallthru
          _
      $region76: #{mlp_forward.1} parent=5 // pred_fallthru
        _
    $region6: #{mlp_forward.1} parent=1 // loop_footer
      %s20 = sadd.s32 1, %s16
    $region7: #{mlp_forward.1} parent=1 // loop_footer_branch
      %15 = sbr.rel target = $region3
    $region8: #{mlp_forward.1} parent=1 // loop_exit
      _
    %628 = vsyncpa [#allocation5], 1
    %s629 = scalar_lea.sflag [#allocation5], 1
    %630 = vsyncpa %s629, 1
    %631 = vsyncpa [#allocation7], 1

</llo_original>
